<compile_context>
chip_gen: v7x
topology: tpu7x:2x2x1
jax: 0.10.0
libtpu: 0.0.40
codegen_flags: <defaults>
</compile_context>

<pallas_src>
import jax
import jax.numpy as jnp
from jax.experimental import pallas as pl
from jax.experimental.pallas import tpu as pltpu


def _conv1x1_vpu_kernel(x_ref, w_ref, b_ref, o_ref):
    # x_ref: (Bn, Cin, T)  w_ref: (Cout, Cin)  b_ref: (Cout, 1)  o_ref: (Bn, Cout, T)
    # Unrolled broadcast FMAs on the VPU; spatial T is lane-dense.
    x = x_ref[...]
    w = w_ref[...]
    b = b_ref[...]                                  # (Cout, 1)
    cin = x.shape[1]
    # Bias folded into the first term: saves one full (Bn, Cout, T) add pass.
    acc = w[:, 0].reshape(1, -1, 1) * x[:, 0:1, :] + b[None, :, :]
    for ci in range(1, cin):
        acc = acc + w[:, ci].reshape(1, -1, 1) * x[:, ci:ci + 1, :]
    o_ref[...] = acc.astype(o_ref.dtype)


def _conv1x1_mxu_kernel(x_ref, w_ref, b_ref, o_ref):
    # Large-channel path: per-batch (Cout, Cin) @ (Cin, T) on the MXU,
    # f32 accumulate.  Bn is small (usually 1 when channels are large).
    w = w_ref[...]
    b = b_ref[...]                                  # (Cout, 1)
    bn = o_ref.shape[0]
    for bi in range(bn):
        acc = jnp.dot(w, x_ref[bi], preferred_element_type=jnp.float32)
        o_ref[bi] = (acc + b).astype(o_ref.dtype)


def merge_forward(x_nchw, weight, bias, *, target_step_bytes=8 << 20):
    """1x1 conv with bias, computed directly in NCHW.

    x_nchw: (N, Cin, H, W)                      float32
    weight: (Cout, Cin) or (Cout, Cin, 1, 1)    float32
    bias:   (Cout,)                             float32
    returns (N, Cout, H, W)                     float32
    """
    N, Cin, H, W = x_nchw.shape
    if weight.ndim == 4:  # PyTorch conv weight layout (Cout, Cin, 1, 1)
        weight = weight.reshape(weight.shape[0], weight.shape[1])
    Cout = weight.shape[0]
    HW = H * W

    # Free, contiguous reshapes only — no HBM transpose passes.
    x3 = x_nchw.reshape(N, Cin, HW)
    b_col = bias.reshape(Cout, 1)

    # ---------------- generation-aware sizing --------------------------------
    dkind = ""
    try:
        dkind = jax.devices()[0].device_kind.lower()
    except Exception:
        pass
    try:
        vmem_cap = int(getattr(pltpu.get_tpu_info(), "vmem_capacity_bytes",
                               128 << 20))
    except Exception:
        vmem_cap = 128 << 20
    # Explicit scoped-VMEM request with headroom below physical:
    #   v7x: 64 MiB physical -> ask 40 MiB; v5e/v6e: 128 MiB -> ask 96 MiB.
    vmem_limit = (40 << 20) if vmem_cap <= (64 << 20) else (96 << 20)
    # Input + output blocks are double-buffered; keep one step's (in+out)
    # bytes under ~1/3 of the scoped limit.
    max_step_bytes = vmem_limit // 3
    step_bytes = min(target_step_bytes, max_step_bytes)

    bytes_per_px = (Cin + Cout) * 4          # f32 input + output per pixel
    per_image_bytes = HW * bytes_per_px

    if per_image_bytes >= step_bytes:
        # Large images: tile the spatial axis inside one image per step.
        Bn = 1
        T = min(HW, max(128, ((step_bytes // bytes_per_px) // 128) * 128))
        # Prefer T dividing HW so the tail block is not a masked partial store.
        if HW % T != 0:
            for cand in range(T, max(127, T // 2), -128):
                if HW % cand == 0:
                    T = cand
                    break
    else:
        # Small images: whole image per step; pack batch entries to amortize
        # the ~0.35 us fixed per-grid-step pipeline overhead.
        T = HW
        Bn = max(1, min(N, step_bytes // max(1, per_image_bytes)))

    grid = (pl.cdiv(N, Bn), pl.cdiv(HW, T))

    # VPU-vs-MXU threshold: v7x's higher per-TC HBM BW stops hiding the
    # unrolled VALU FMAs sooner, so cross to the MXU earlier there.
    if "v7" in dkind:
        mxu_threshold = 8
    elif "v5" in dkind:
        mxu_threshold = 24
    else:
        mxu_threshold = 16
    use_mxu = Cin > mxu_threshold
    kernel = _conv1x1_mxu_kernel if use_mxu else _conv1x1_vpu_kernel
    # TODO(synk): on v5e, if the MXU path ever sees Cin/Cout >= ~64, pad the
    # channel dims toward multiples of 128 (v5e MXU tiles are 128x128).

    out = pl.pallas_call(
        kernel,
        out_shape=jax.ShapeDtypeStruct((N, Cout, HW), x_nchw.dtype),
        grid=grid,
        in_specs=[
            # activation tile: (Bn, Cin, T) — batch-blocked, spatial lane-dense
            pl.BlockSpec((Bn, Cin, T), lambda n, j: (n, 0, j)),
            # full weight, VMEM-resident every step
            pl.BlockSpec((Cout, Cin), lambda n, j: (0, 0)),
            # bias as a (Cout, 1) column, VMEM-resident every step
            pl.BlockSpec((Cout, 1), lambda n, j: (0, 0)),
        ],
        out_specs=pl.BlockSpec((Bn, Cout, T), lambda n, j: (n, 0, j)),
        compiler_params=pltpu.CompilerParams(
            dimension_semantics=("parallel", "parallel"),
            vmem_limit_bytes=vmem_limit,
        ),
    )(x3, weight, b_col)

    return out.reshape(N, Cout, H, W)


def _ref_conv1x1(x, w, b):
    return jnp.einsum("nchw,oc->nohw", x, w) + b[None, :, None, None]


if __name__ == "__main__":
    key = jax.random.PRNGKey(0)
    k_x, k_w, k_b, k_x2, k_x3, k_w3, k_b3 = jax.random.split(key, 7)

    # --- Case 1: the Merge use case (Cin=4, Cout=8), small image ------------
    N, Cin, H, W = 2, 4, 16, 16
    Cout = 8
    x = jax.random.normal(k_x, (N, Cin, H, W), dtype=jnp.float32)
    weight = jax.random.normal(k_w, (Cout, Cin), dtype=jnp.float32) * 0.1
    bias = jax.random.normal(k_b, (Cout,), dtype=jnp.float32) * 0.1

    y = merge_forward(x, weight, bias)
    jax.block_until_ready(y)
    y_ref = _ref_conv1x1(x, weight, bias)
    assert y.shape == (N, Cout, H, W)
    assert jnp.allclose(y, y_ref, atol=1e-5, rtol=1e-5)

    # --- Case 2: exercise the spatial-tiling branch (forced small step) -----
    x2 = jax.random.normal(k_x2, (2, 4, 64, 64), dtype=jnp.float32)
    y2 = merge_forward(x2, weight, bias, target_step_bytes=64 << 10)
    jax.block_until_ready(y2)
    assert jnp.allclose(y2, _ref_conv1x1(x2, weight, bias), atol=1e-5, rtol=1e-5)

    # --- Case 3: exercise the MXU (large-channel) path ----------------------
    Cin3, Cout3 = 32, 32
    x3 = jax.random.normal(k_x3, (2, Cin3, 8, 8), dtype=jnp.float32)
    w3 = jax.random.normal(k_w3, (Cout3, Cin3), dtype=jnp.float32) * 0.1
    b3 = jax.random.normal(k_b3, (Cout3,), dtype=jnp.float32) * 0.1
    y3 = merge_forward(x3, w3, b3)
    jax.block_until_ready(y3)
    assert jnp.allclose(y3, _ref_conv1x1(x3, w3, b3), atol=1e-4, rtol=1e-4)

    print("KERNEL_OK")
</pallas_src>

<mosaic_0001>
module attributes {stable_mosaic.version = 11 : i64} {
  func.func @_conv1x1_vpu_kernel(%arg0: i32, %arg1: i32, %arg2: memref<2x4x256xf32, #tpu.memory_space<vmem>>, %arg3: memref<8x4xf32, #tpu.memory_space<vmem>>, %arg4: memref<8x1xf32, #tpu.memory_space<vmem>>, %arg5: memref<2x8x256xf32, #tpu.memory_space<vmem>>) attributes {dimension_semantics = [#tpu.dimension_semantics<parallel>, #tpu.dimension_semantics<parallel>], iteration_bounds = array<i64: 1, 1>, scalar_prefetch = 0 : i64, scratch_operands = 0 : i64, tpu.core_type = #tpu.core_type<tc>, window_params = [{transform_indices = @transform_0, window_bounds = array<i64: 2, 4, 256>}, {pipeline_mode = #tpu.pipeline_mode<synchronous>, transform_indices = @transform_1, window_bounds = array<i64: 8, 4>}, {pipeline_mode = #tpu.pipeline_mode<synchronous>, transform_indices = @transform_2, window_bounds = array<i64: 8, 1>}, {transform_indices = @transform_3, window_bounds = array<i64: 2, 8, 256>}]} {
    %c0 = arith.constant 0 : index
    %c0_0 = arith.constant 0 : index
    %c0_1 = arith.constant 0 : index
    %0 = vector.load %arg2[%c0, %c0_0, %c0_1] : memref<2x4x256xf32, #tpu.memory_space<vmem>>, vector<2x4x256xf32>
    %c0_2 = arith.constant 0 : index
    %c0_3 = arith.constant 0 : index
    %1 = vector.load %arg3[%c0_2, %c0_3] : memref<8x4xf32, #tpu.memory_space<vmem>>, vector<8x4xf32>
    %c0_4 = arith.constant 0 : index
    %c0_5 = arith.constant 0 : index
    %2 = vector.load %arg4[%c0_4, %c0_5] : memref<8x1xf32, #tpu.memory_space<vmem>>, vector<8x1xf32>
    %3 = vector.extract_strided_slice %1 {offsets = [0, 0], sizes = [8, 1], strides = [1, 1]} : vector<8x4xf32> to vector<8x1xf32>
    %4 = vector.shape_cast %3 : vector<8x1xf32> to vector<8xf32>
    %5 = vector.shape_cast %4 : vector<8xf32> to vector<1x8x1xf32>
    %6 = vector.extract_strided_slice %0 {offsets = [0, 0, 0], sizes = [2, 1, 256], strides = [1, 1, 1]} : vector<2x4x256xf32> to vector<2x1x256xf32>
    %7 = vector.broadcast %5 : vector<1x8x1xf32> to vector<2x8x256xf32>
    %8 = vector.broadcast %6 : vector<2x1x256xf32> to vector<2x8x256xf32>
    %9 = arith.mulf %7, %8 : vector<2x8x256xf32>
    %10 = vector.shape_cast %2 : vector<8x1xf32> to vector<1x8x1xf32>
    %11 = vector.broadcast %10 : vector<1x8x1xf32> to vector<2x8x256xf32>
    %12 = arith.addf %9, %11 : vector<2x8x256xf32>
    %13 = vector.extract_strided_slice %1 {offsets = [0, 1], sizes = [8, 1], strides = [1, 1]} : vector<8x4xf32> to vector<8x1xf32>
    %14 = vector.shape_cast %13 : vector<8x1xf32> to vector<8xf32>
    %15 = vector.shape_cast %14 : vector<8xf32> to vector<1x8x1xf32>
    %16 = vector.extract_strided_slice %0 {offsets = [0, 1, 0], sizes = [2, 1, 256], strides = [1, 1, 1]} : vector<2x4x256xf32> to vector<2x1x256xf32>
    %17 = vector.broadcast %15 : vector<1x8x1xf32> to vector<2x8x256xf32>
    %18 = vector.broadcast %16 : vector<2x1x256xf32> to vector<2x8x256xf32>
    %19 = arith.mulf %17, %18 : vector<2x8x256xf32>
    %20 = arith.addf %12, %19 : vector<2x8x256xf32>
    %21 = vector.extract_strided_slice %1 {offsets = [0, 2], sizes = [8, 1], strides = [1, 1]} : vector<8x4xf32> to vector<8x1xf32>
    %22 = vector.shape_cast %21 : vector<8x1xf32> to vector<8xf32>
    %23 = vector.shape_cast %22 : vector<8xf32> to vector<1x8x1xf32>
    %24 = vector.extract_strided_slice %0 {offsets = [0, 2, 0], sizes = [2, 1, 256], strides = [1, 1, 1]} : vector<2x4x256xf32> to vector<2x1x256xf32>
    %25 = vector.broadcast %23 : vector<1x8x1xf32> to vector<2x8x256xf32>
    %26 = vector.broadcast %24 : vector<2x1x256xf32> to vector<2x8x256xf32>
    %27 = arith.mulf %25, %26 : vector<2x8x256xf32>
    %28 = arith.addf %20, %27 : vector<2x8x256xf32>
    %29 = vector.extract_strided_slice %1 {offsets = [0, 3], sizes = [8, 1], strides = [1, 1]} : vector<8x4xf32> to vector<8x1xf32>
    %30 = vector.shape_cast %29 : vector<8x1xf32> to vector<8xf32>
    %31 = vector.shape_cast %30 : vector<8xf32> to vector<1x8x1xf32>
    %32 = vector.extract_strided_slice %0 {offsets = [0, 3, 0], sizes = [2, 1, 256], strides = [1, 1, 1]} : vector<2x4x256xf32> to vector<2x1x256xf32>
    %33 = vector.broadcast %31 : vector<1x8x1xf32> to vector<2x8x256xf32>
    %34 = vector.broadcast %32 : vector<2x1x256xf32> to vector<2x8x256xf32>
    %35 = arith.mulf %33, %34 : vector<2x8x256xf32>
    %36 = arith.addf %28, %35 : vector<2x8x256xf32>
    %c0_6 = arith.constant 0 : index
    %c0_7 = arith.constant 0 : index
    %c0_8 = arith.constant 0 : index
    %37 = vector.load %arg5[%c0_6, %c0_7, %c0_8] : memref<2x8x256xf32, #tpu.memory_space<vmem>>, vector<2x8x256xf32>
    tpu.vector_store %arg5[%c0_6, %c0_7, %c0_8], %36 {strides = array<i32>} : memref<2x8x256xf32, #tpu.memory_space<vmem>>, vector<2x8x256xf32>,
    return
  }
  func.func @transform_0(%arg0: i32, %arg1: i32) -> (i32, i32, i32) {
    %c0_i32 = arith.constant 0 : i32
    %c0_i32_0 = arith.constant 0 : i32
    return %arg0, %c0_i32, %arg1 : i32, i32, i32
  }
  func.func @transform_1(%arg0: i32, %arg1: i32) -> (i32, i32) {
    %c0_i32 = arith.constant 0 : i32
    %c0_i32_0 = arith.constant 0 : i32
    %c0_i32_1 = arith.constant 0 : i32
    return %c0_i32, %c0_i32_0 : i32, i32
  }
  func.func @transform_2(%arg0: i32, %arg1: i32) -> (i32, i32) {
    %c0_i32 = arith.constant 0 : i32
    %c0_i32_0 = arith.constant 0 : i32
    %c0_i32_1 = arith.constant 0 : i32
    return %c0_i32, %c0_i32_0 : i32, i32
  }
  func.func @transform_3(%arg0: i32, %arg1: i32) -> (i32, i32, i32) {
    %c0_i32 = arith.constant 0 : i32
    %c0_i32_0 = arith.constant 0 : i32
    return %arg0, %c0_i32, %arg1 : i32, i32, i32
  }
}

</mosaic_0001>

<llo_original>
// kernel: tpu_custom_call.1
$region0: #{tpu_custom_call.1}
  #allocation0 [shape = 'u32[]', space=smem, size = 0x4, offset = 0x4, fixed_abs, tag = 'smem constant byte address 0x4 - core index']
  #allocation1 [shape = 'u32[144,128]{1,0:T(1,128)}', space=vmem, size = 0x12000, scoped, tag = 'internal scratch']
  %s0 = inlined_call_operand.hbm [shape: f32[2,4,256], index: 0, kind: input, shape index: {}]
  %s1 = inlined_call_operand.hbm [shape: f32[8,4], index: 1, kind: input, shape index: {}]
  %s2 = inlined_call_operand.hbm [shape: f32[8,1], index: 2, kind: input, shape index: {}]
  %s3 = inlined_call_operand.hbm [shape: f32[2,8,256], index: 3, kind: output, shape index: {}]
  %s4 = sld [smem:[#allocation0]]
  $region34: #{tpu_custom_call.1} parent=0
    _
  %s6 = ssub.s32 1, %s4
  %s7 = scalar_select 0, %s6, %s4
  $region1: #{tpu_custom_call.1} parent=0
    #allocation2 [shape = 'u8[8192]{0}', space=vmem, size = 0x2000, scoped, tag = 'input window, operand 0, single buffered']
    #allocation3 [shape = 's32[1]{0}', space=sflag, size = 0x4, scoped, tag = 'scoped memory for tpu_custom_call.1']
    #allocation4 [shape = 's32[1]{0}', space=sflag, size = 0x4, scoped, tag = 'scoped memory for tpu_custom_call.1']
    #allocation5 [shape = 'u8[4096]{0}', space=vmem, size = 0x1000, scoped, tag = 'input window, operand 1, single buffered']
    #allocation6 [shape = 's32[1]{0}', space=sflag, size = 0x4, scoped, tag = 'scoped memory for tpu_custom_call.1']
    #allocation7 [shape = 'u8[4096]{0}', space=vmem, size = 0x1000, scoped, tag = 'input window, operand 2, single buffered']
    #allocation8 [shape = 'u8[16384]{0}', space=vmem, size = 0x4000, scoped, tag = 'output window, operand 0, single buffered']
    %8 = vsyncpa [#allocation3], 0
    %9 = vsyncpa [#allocation6], 0
    %10 = vsyncpa [#allocation4], 0
    // Predicated region
    $region2: #{tpu_custom_call.1} parent=1 // pred_check
      _
    $region3: #{tpu_custom_call.1} parent=1 // pred_check_branch
      %12 = sbr.rel (0) target = $region5
    $region4: #{tpu_custom_call.1} parent=1 // pred_region
      %s14 = ssub.s32 256, 256
      %15 = vsyncadd [#allocation3], %s14
      %s16 = sshll.u32 [#allocation2], 4
      %s17 = int_to_ptr.vmem [resolvable:$true] %s16
      %22 = dma.hbm_to_vmem [thread:$0]  %s0, 256, %s17, [#allocation3], 128, 128, 8
    $region5: #{tpu_custom_call.1} parent=1 // pred_fallthru
      _
    // Predicated region
    $region6: #{tpu_custom_call.1} parent=1 // pred_check
      _
    $region7: #{tpu_custom_call.1} parent=1 // pred_check_branch
      %24 = sbr.rel (0) target = $region9
    $region8: #{tpu_custom_call.1} parent=1 // pred_region
      %s26 = ssub.s32 128, 128
      %27 = vsyncadd [#allocation6], %s26
      %s29 = sshll.u32 [#allocation5], 4
      %s30 = int_to_ptr.vmem [resolvable:$true] %s29
      %32 = dma.hbm_to_vmem [thread:$0]  %s1, 128, %s30, [#allocation6]
    $region9: #{tpu_custom_call.1} parent=1 // pred_fallthru
      _
    // Predicated region
    $region10: #{tpu_custom_call.1} parent=1 // pred_check
      _
    $region11: #{tpu_custom_call.1} parent=1 // pred_check_branch
      %34 = sbr.rel (0) target = $region13
    $region12: #{tpu_custom_call.1} parent=1 // pred_region
      %s36 = ssub.s32 128, 128
      %37 = vsyncadd [#allocation6], %s36
      %s39 = sshll.u32 [#allocation7], 4
      %s40 = int_to_ptr.vmem [resolvable:$true] %s39
      %42 = dma.hbm_to_vmem [thread:$0]  %s2, 128, %s40, [#allocation6]
    $region13: #{tpu_custom_call.1} parent=1 // pred_fallthru
      _
    // Predicated region
    $region14: #{tpu_custom_call.1} parent=1 // pred_check
      _
    $region15: #{tpu_custom_call.1} parent=1 // pred_check_branch
      %44 = sbr.rel (0) target = $region17
    $region16: #{tpu_custom_call.1} parent=1 // pred_region
      %45 = dma.done [#allocation3], 256
    $region17: #{tpu_custom_call.1} parent=1 // pred_fallthru
      _
    // Predicated region
    $region18: #{tpu_custom_call.1} parent=1 // pred_check
      _
    $region19: #{tpu_custom_call.1} parent=1 // pred_check_branch
      %47 = sbr.rel (0) target = $region21
    $region20: #{tpu_custom_call.1} parent=1 // pred_region
      %48 = dma.done [#allocation6], 128
    $region21: #{tpu_custom_call.1} parent=1 // pred_fallthru
      _
    // Predicated region
    $region22: #{tpu_custom_call.1} parent=1 // pred_check
      _
    $region23: #{tpu_custom_call.1} parent=1 // pred_check_branch
      %50 = sbr.rel (0) target = $region25
    $region24: #{tpu_custom_call.1} parent=1 // pred_region
      %51 = dma.done [#allocation6], 128
    $region25: #{tpu_custom_call.1} parent=1 // pred_fallthru
      _
    %v52 = vld [vmem:[#allocation2] sm:$0xff]
    %v53 = vld [vmem:[#allocation2 + $0x8] sm:$0xff]
    %v54 = vld [vmem:[#allocation5] sm:$0xff]
    %v55 = vld [vmem:[#allocation7] sm:$0xff]
    %57 = vset.pattern.permute.xlu0 0
    %58 = vperm.xlu0 %57, %v54
    %v59 = vpop.permute.xlu0 %58
    %v63 = vlaneseq
    %v64 = vshrl.u32 %v63, 7
    %v65 = vsub.s32 0, %v64
    %v66 = vrot.slane %v52, %v65
    %v67 = vlaneseq
    %v68 = vshrl.u32 %v67, 7
    %v69 = vsub.s32 4, %v68
    %v70 = vrot.slane %v52, %v69
    %v71 = vlaneseq
    %v72 = vshrl.u32 %v71, 7
    %v73 = vsub.s32 0, %v72
    %v74 = vrot.slane %v53, %v73
    %v75 = vlaneseq
    %v76 = vshrl.u32 %v75, 7
    %v77 = vsub.s32 4, %v76
    %v78 = vrot.slane %v53, %v77
    %v83 = vlaneseq
    %v84 = vshrl.u32 %v83, 7
    %v85 = vsub.s32 0, %v84
    %v86 = vrot.slane %v66, %v85
    %v87 = vlaneseq
    %v88 = vshrl.u32 %v87, 7
    %v89 = vsub.s32 0, %v88
    %v90 = vrot.slane %v70, %v89
    %v91 = vlaneseq
    %v92 = vshrl.u32 %v91, 7
    %v93 = vsub.s32 0, %v92
    %v94 = vrot.slane %v74, %v93
    %v95 = vlaneseq
    %v96 = vshrl.u32 %v95, 7
    %v97 = vsub.s32 0, %v96
    %v98 = vrot.slane %v78, %v97
    %v99 = vmul.f32 %v59, %v86
    %v100 = vmul.f32 %v59, %v90
    %v101 = vmul.f32 %v59, %v94
    %v102 = vmul.f32 %v59, %v98
    %104 = vset.pattern.permute.xlu0 0
    %105 = vperm.xlu0 %104, %v55
    %v106 = vpop.permute.xlu0 %105
    %v108 = vadd.f32 %v99, %v106
    %v109 = vadd.f32 %v100, %v106
    %v110 = vadd.f32 %v101, %v106
    %v111 = vadd.f32 %v102, %v106
    %112 = vset.pattern.permute.xlu0 1
    %113 = vperm.xlu0 %112, %v54
    %v114 = vpop.permute.xlu0 %113
    %v116 = vlaneseq
    %v117 = vshrl.u32 %v116, 7
    %v118 = vsub.s32 1, %v117
    %v119 = vrot.slane %v52, %v118
    %v120 = vlaneseq
    %v121 = vshrl.u32 %v120, 7
    %v122 = vsub.s32 5, %v121
    %v123 = vrot.slane %v52, %v122
    %v124 = vlaneseq
    %v125 = vshrl.u32 %v124, 7
    %v126 = vsub.s32 1, %v125
    %v127 = vrot.slane %v53, %v126
    %v128 = vlaneseq
    %v129 = vshrl.u32 %v128, 7
    %v130 = vsub.s32 5, %v129
    %v131 = vrot.slane %v53, %v130
    %v136 = vlaneseq
    %v137 = vshrl.u32 %v136, 7
    %v138 = vsub.s32 1, %v137
    %v139 = vrot.slane %v119, %v138
    %v140 = vlaneseq
    %v141 = vshrl.u32 %v140, 7
    %v142 = vsub.s32 1, %v141
    %v143 = vrot.slane %v123, %v142
    %v144 = vlaneseq
    %v145 = vshrl.u32 %v144, 7
    %v146 = vsub.s32 1, %v145
    %v147 = vrot.slane %v127, %v146
    %v148 = vlaneseq
    %v149 = vshrl.u32 %v148, 7
    %v150 = vsub.s32 1, %v149
    %v151 = vrot.slane %v131, %v150
    %v152 = vmul.f32 %v114, %v139
    %v153 = vmul.f32 %v114, %v143
    %v154 = vmul.f32 %v114, %v147
    %v155 = vmul.f32 %v114, %v151
    %v156 = vadd.f32 %v108, %v152
    %v157 = vadd.f32 %v109, %v153
    %v158 = vadd.f32 %v110, %v154
    %v159 = vadd.f32 %v111, %v155
    %160 = vset.pattern.permute.xlu0 2
    %161 = vperm.xlu0 %160, %v54
    %v162 = vpop.permute.xlu0 %161
    %v164 = vlaneseq
    %v165 = vshrl.u32 %v164, 7
    %v166 = vsub.s32 2, %v165
    %v167 = vrot.slane %v52, %v166
    %v168 = vlaneseq
    %v169 = vshrl.u32 %v168, 7
    %v170 = vsub.s32 6, %v169
    %v171 = vrot.slane %v52, %v170
    %v172 = vlaneseq
    %v173 = vshrl.u32 %v172, 7
    %v174 = vsub.s32 2, %v173
    %v175 = vrot.slane %v53, %v174
    %v176 = vlaneseq
    %v177 = vshrl.u32 %v176, 7
    %v178 = vsub.s32 6, %v177
    %v179 = vrot.slane %v53, %v178
    %v184 = vlaneseq
    %v185 = vshrl.u32 %v184, 7
    %v186 = vsub.s32 2, %v185
    %v187 = vrot.slane %v167, %v186
    %v188 = vlaneseq
    %v189 = vshrl.u32 %v188, 7
    %v190 = vsub.s32 2, %v189
    %v191 = vrot.slane %v171, %v190
    %v192 = vlaneseq
    %v193 = vshrl.u32 %v192, 7
    %v194 = vsub.s32 2, %v193
    %v195 = vrot.slane %v175, %v194
    %v196 = vlaneseq
    %v197 = vshrl.u32 %v196, 7
    %v198 = vsub.s32 2, %v197
    %v199 = vrot.slane %v179, %v198
    %v200 = vmul.f32 %v162, %v187
    %v201 = vmul.f32 %v162, %v191
    %v202 = vmul.f32 %v162, %v195
    %v203 = vmul.f32 %v162, %v199
    %v204 = vadd.f32 %v156, %v200
    %v205 = vadd.f32 %v157, %v201
    %v206 = vadd.f32 %v158, %v202
    %v207 = vadd.f32 %v159, %v203
    %208 = vset.pattern.permute.xlu0 3
    %209 = vperm.xlu0 %208, %v54
    %v210 = vpop.permute.xlu0 %209
    %v212 = vlaneseq
    %v213 = vshrl.u32 %v212, 7
    %v214 = vsub.s32 3, %v213
    %v215 = vrot.slane %v52, %v214
    %v216 = vlaneseq
    %v217 = vshrl.u32 %v216, 7
    %v218 = vsub.s32 7, %v217
    %v219 = vrot.slane %v52, %v218
    %v220 = vlaneseq
    %v221 = vshrl.u32 %v220, 7
    %v222 = vsub.s32 3, %v221
    %v223 = vrot.slane %v53, %v222
    %v224 = vlaneseq
    %v225 = vshrl.u32 %v224, 7
    %v226 = vsub.s32 7, %v225
    %v227 = vrot.slane %v53, %v226
    %v232 = vlaneseq
    %v233 = vshrl.u32 %v232, 7
    %v234 = vsub.s32 3, %v233
    %v235 = vrot.slane %v215, %v234
    %v236 = vlaneseq
    %v237 = vshrl.u32 %v236, 7
    %v238 = vsub.s32 3, %v237
    %v239 = vrot.slane %v219, %v238
    %v240 = vlaneseq
    %v241 = vshrl.u32 %v240, 7
    %v242 = vsub.s32 3, %v241
    %v243 = vrot.slane %v223, %v242
    %v244 = vlaneseq
    %v245 = vshrl.u32 %v244, 7
    %v246 = vsub.s32 3, %v245
    %v247 = vrot.slane %v227, %v246
    %v248 = vmul.f32 %v210, %v235
    %v249 = vmul.f32 %v210, %v239
    %v250 = vmul.f32 %v210, %v243
    %v251 = vmul.f32 %v210, %v247
    %v252 = vadd.f32 %v204, %v248
    %v253 = vadd.f32 %v205, %v249
    %v254 = vadd.f32 %v206, %v250
    %v255 = vadd.f32 %v207, %v251
    %256 = vst [vmem:[#allocation8] sm:$0xff] %v252
    %257 = vst [vmem:[#allocation8 + $0x8] sm:$0xff] %v253
    %258 = vst [vmem:[#allocation8 + $0x10] sm:$0xff] %v254
    %259 = vst [vmem:[#allocation8 + $0x18] sm:$0xff] %v255
    // Predicated region
    $region26: #{tpu_custom_call.1} parent=1 // pred_check
      _
    $region27: #{tpu_custom_call.1} parent=1 // pred_check_branch
      %261 = sbr.rel (0) target = $region29
    $region28: #{tpu_custom_call.1} parent=1 // pred_region
      %s263 = ssub.s32 512, 512
      %264 = vsyncadd [#allocation4], %s263
      %s265 = sshll.u32 [#allocation8], 4
      %s266 = int_to_ptr.vmem [resolvable:$true] %s265
      %271 = dma.vmem_to_hbm [thread:$0]  %s266, 512, %s3, [#allocation4], 256, 256, 16
    $region29: #{tpu_custom_call.1} parent=1 // pred_fallthru
      _
    // Predicated region
    $region30: #{tpu_custom_call.1} parent=1 // pred_check
      _
    $region31: #{tpu_custom_call.1} parent=1 // pred_check_branch
      %273 = sbr.rel (0) target = $region33
    $region32: #{tpu_custom_call.1} parent=1 // pred_region
      %274 = dma.done [#allocation4], 512
    $region33: #{tpu_custom_call.1} parent=1 // pred_fallthru
      _
    %275 = vsyncpa [#allocation3], 1
    %276 = vsyncpa [#allocation6], 1
    %277 = vsyncpa [#allocation4], 1

</llo_original>
